<compile_context>
chip_gen: v7x
topology: tpu7x:2x2x1
jax: 0.10.0
libtpu: 0.0.40
codegen_flags: <defaults>
</compile_context>

<pallas_src>
import functools

import numpy as np
import jax
import jax.numpy as jnp
from jax.experimental import pallas as pl
from jax.experimental.pallas import tpu as pltpu


def _round_up(x, m):
    return ((x + m - 1) // m) * m


def _nms_kernel(rep_ref, rel_ref, out_ref, *, rel_thr, rep_thr):
    rep = rep_ref[...]          # (TB*H_pad, W_pad) float32
    rel = rel_ref[...]          # (TB*H_pad, W_pad) float32
    rows, cols = rep.shape

    # Separable 3x3 max filter, stride 1, -inf padding.  The wrapper pads each
    # plane with >=1 row and >=1 column of -inf, and blocks contain whole
    # planes, so every wrap-around of the rolls below lands in -inf padding
    # (or in a padded output position that is discarded by the thresholds).
    h_a = pltpu.roll(rep, 1, 1)           # lane-shift by +1
    h_b = pltpu.roll(rep, cols - 1, 1)    # lane-shift by -1
    pooled = jnp.maximum(rep, jnp.maximum(h_a, h_b))
    v_a = pltpu.roll(pooled, 1, 0)        # sublane-shift by +1
    v_b = pltpu.roll(pooled, rows - 1, 0)  # sublane-shift by -1
    pooled = jnp.maximum(pooled, jnp.maximum(v_a, v_b))

    maxima = (rep == pooled)
    maxima = maxima & (rep >= jnp.float32(rep_thr))
    maxima = maxima & (rel >= jnp.float32(rel_thr))
    out_ref[...] = maxima.astype(jnp.int8)


def _pick_tb(bc, h_pad, w_pad, vmem_budget_bytes=14 * 1024 * 1024):
    """Number of (H_pad, W_pad) planes per grid step."""
    # Per plane: 2 f32 inputs + 1 int8 output, double-buffered by the pipeline.
    bytes_per_plane = h_pad * w_pad * (4 + 4 + 1) * 2
    cap = max(1, vmem_budget_bytes // bytes_per_plane)
    if bc > 1:
        # keep >=2 grid steps so both v7x TensorCores get work
        cap = min(cap, max(1, bc // 2))
    for d in range(min(cap, bc), 0, -1):
        if bc % d == 0:
            return d
    return 1


def nms_maxima_mask_padded(reliability, repeatability, rel_thr=0.7, rep_thr=0.7):
    """Returns (mask_padded, (H, W)).

    mask_padded: int8 array of shape (B, C, H_pad, W_pad); entries in the
    padded region are guaranteed 0, real entries are 1 where a maximum passes
    both thresholds.
    """
    assert reliability.shape == repeatability.shape
    B, C, H, W = repeatability.shape
    BC = B * C
    # >= 1 pad row / col of -inf so roll wrap-around is harmless; lane-dense W.
    H_pad = _round_up(H + 1, 8)
    W_pad = _round_up(W + 1, 128)

    rep = repeatability.astype(jnp.float32).reshape(BC, H, W)
    rel = reliability.astype(jnp.float32).reshape(BC, H, W)
    pad_cfg = ((0, 0), (0, H_pad - H), (0, W_pad - W))
    rep = jnp.pad(rep, pad_cfg, constant_values=-jnp.inf)
    rel = jnp.pad(rel, pad_cfg, constant_values=0.0)

    # Fold planes into the sublane axis -> plain 2D kernel, 2D rolls.
    rep2d = rep.reshape(BC * H_pad, W_pad)
    rel2d = rel.reshape(BC * H_pad, W_pad)

    tb = _pick_tb(BC, H_pad, W_pad)
    rows = tb * H_pad
    grid = (BC // tb,)

    kernel = functools.partial(_nms_kernel,
                               rel_thr=float(rel_thr), rep_thr=float(rep_thr))

    mask2d = pl.pallas_call(
        kernel,
        out_shape=jax.ShapeDtypeStruct((BC * H_pad, W_pad), jnp.int8),
        grid_spec=pltpu.PrefetchScalarGridSpec(
            num_scalar_prefetch=0,
            grid=grid,
            in_specs=[
                pl.BlockSpec((rows, W_pad), lambda i: (i, 0)),
                pl.BlockSpec((rows, W_pad), lambda i: (i, 0)),
            ],
            out_specs=pl.BlockSpec((rows, W_pad), lambda i: (i, 0)),
        ),
        compiler_params=pltpu.CompilerParams(
            dimension_semantics=("parallel",),
            vmem_limit_bytes=32 * 1024 * 1024,
        ),
    )(rep2d, rel2d)

    return mask2d.reshape(B, C, H_pad, W_pad), (H, W)


def nms_maxima_mask(reliability, repeatability, rel_thr=0.7, rep_thr=0.7):
    """Boolean maxima mask of shape (B, C, H, W) (convenience helper)."""
    mask_padded, (H, W) = nms_maxima_mask_padded(
        reliability, repeatability, rel_thr, rep_thr)
    return mask_padded[:, :, :H, :W].astype(jnp.bool_)


def non_max_suppression_forward(reliability_list, repeatability_list,
                                rel_thr=0.7, rep_thr=0.7):
    """Mirrors NonMaxSuppression.forward: returns (2, N) array of (y, x)."""
    assert len(reliability_list) == len(repeatability_list) == 1
    reliability, repeatability = reliability_list[0], repeatability_list[0]

    mask_padded, _ = nms_maxima_mask_padded(
        reliability, repeatability, rel_thr, rep_thr)
    mask_padded = jax.block_until_ready(mask_padded)

    # TODO(synk): nonzero() has a data-dependent output shape, so index
    # extraction is performed on the host with numpy rather than in Pallas.
    # Padded positions are guaranteed 0, so no slicing/cast pass is needed.
    idx = np.stack(np.nonzero(np.asarray(mask_padded)), axis=0)  # (4, N)
    return jnp.asarray(idx[2:4])                                  # (2, N): y, x


if __name__ == "__main__":
    key = jax.random.PRNGKey(0)
    k1, k2 = jax.random.split(key)
    B, C, H, W = 2, 4, 16, 16
    # scores in [0, 1], like r2d2 reliability / repeatability maps
    reliability = jax.nn.sigmoid(jax.random.normal(k1, (B, C, H, W)) * 2.0)
    repeatability = jax.nn.sigmoid(jax.random.normal(k2, (B, C, H, W)) * 2.0)

    coords = non_max_suppression_forward([reliability], [repeatability])
    coords = jax.block_until_ready(coords)
    assert coords.ndim == 2 and coords.shape[0] == 2

    # numpy reference (bit-exact: max + compare of the same f32 values)
    rep_np = np.asarray(repeatability, np.float32)
    rel_np = np.asarray(reliability, np.float32)
    padded = np.full((B, C, H + 2, W + 2), -np.inf, np.float32)
    padded[:, :, 1:-1, 1:-1] = rep_np
    pooled = np.full((B, C, H, W), -np.inf, np.float32)
    for dy in range(3):
        for dx in range(3):
            pooled = np.maximum(pooled, padded[:, :, dy:dy + H, dx:dx + W])
    ref_mask = (rep_np == pooled) & (rep_np >= 0.7) & (rel_np >= 0.7)
    ref_idx = np.stack(np.nonzero(ref_mask), axis=0)[2:4]
    assert np.array_equal(np.asarray(coords), ref_idx), \
        "kernel coords do not match numpy reference"

    print("KERNEL_OK")
</pallas_src>

<mosaic_0001>
module attributes {stable_mosaic.version = 11 : i64} {
  func.func @_nms_kernel(%arg0: i32, %arg1: memref<96x128xf32, #tpu.memory_space<vmem>>, %arg2: memref<96x128xf32, #tpu.memory_space<vmem>>, %arg3: memref<96x128xi8, #tpu.memory_space<vmem>>) attributes {dimension_semantics = [#tpu.dimension_semantics<parallel>], iteration_bounds = array<i64: 2>, scalar_prefetch = 0 : i64, scratch_operands = 0 : i64, tpu.core_type = #tpu.core_type<tc>, window_params = [{transform_indices = @transform_0, window_bounds = array<i64: 96, 128>}, {transform_indices = @transform_1, window_bounds = array<i64: 96, 128>}, {transform_indices = @transform_2, window_bounds = array<i64: 96, 128>}]} {
    %c0 = arith.constant 0 : index
    %c0_0 = arith.constant 0 : index
    %0 = vector.load %arg1[%c0, %c0_0] : memref<96x128xf32, #tpu.memory_space<vmem>>, vector<96x128xf32>
    %c0_1 = arith.constant 0 : index
    %c0_2 = arith.constant 0 : index
    %1 = vector.load %arg2[%c0_1, %c0_2] : memref<96x128xf32, #tpu.memory_space<vmem>>, vector<96x128xf32>
    %c1_i32 = arith.constant 1 : i32
    %2 = tpu.dynamic_rotate %0 by %c1_i32 dim 1 : vector<96x128xf32>, i32 -> vector<96x128xf32>
    %c127_i32 = arith.constant 127 : i32
    %3 = tpu.dynamic_rotate %0 by %c127_i32 dim 1 : vector<96x128xf32>, i32 -> vector<96x128xf32>
    %4 = arith.maximumf %2, %3 : vector<96x128xf32>
    %5 = arith.maximumf %0, %4 : vector<96x128xf32>
    %c1_i32_3 = arith.constant 1 : i32
    %6 = tpu.dynamic_rotate %5 by %c1_i32_3 dim 0 : vector<96x128xf32>, i32 -> vector<96x128xf32>
    %c95_i32 = arith.constant 95 : i32
    %7 = tpu.dynamic_rotate %5 by %c95_i32 dim 0 : vector<96x128xf32>, i32 -> vector<96x128xf32>
    %8 = arith.maximumf %6, %7 : vector<96x128xf32>
    %9 = arith.maximumf %5, %8 : vector<96x128xf32>
    %10 = arith.cmpf oeq, %0, %9 : vector<96x128xf32>
    %cst = arith.constant 0.699999988 : f32
    %11 = vector.broadcast %cst : f32 to vector<96x128xf32>
    %12 = arith.cmpf oge, %0, %11 : vector<96x128xf32>
    %13 = arith.andi %10, %12 : vector<96x128xi1>
    %cst_4 = arith.constant 0.699999988 : f32
    %14 = vector.broadcast %cst_4 : f32 to vector<96x128xf32>
    %15 = arith.cmpf oge, %1, %14 : vector<96x128xf32>
    %16 = arith.andi %13, %15 : vector<96x128xi1>
    %17 = arith.extui %16 : vector<96x128xi1> to vector<96x128xi8>
    %c0_5 = arith.constant 0 : index
    %c0_6 = arith.constant 0 : index
    %18 = vector.load %arg3[%c0_5, %c0_6] : memref<96x128xi8, #tpu.memory_space<vmem>>, vector<96x128xi8>
    tpu.vector_store %arg3[%c0_5, %c0_6], %17 {strides = array<i32>} : memref<96x128xi8, #tpu.memory_space<vmem>>, vector<96x128xi8>,
    return
  }
  func.func @transform_0(%arg0: i32) -> (i32, i32) {
    %c0_i32 = arith.constant 0 : i32
    %c0_i32_0 = arith.constant 0 : i32
    return %arg0, %c0_i32 : i32, i32
  }
  func.func @transform_1(%arg0: i32) -> (i32, i32) {
    %c0_i32 = arith.constant 0 : i32
    %c0_i32_0 = arith.constant 0 : i32
    return %arg0, %c0_i32 : i32, i32
  }
  func.func @transform_2(%arg0: i32) -> (i32, i32) {
    %c0_i32 = arith.constant 0 : i32
    %c0_i32_0 = arith.constant 0 : i32
    return %arg0, %c0_i32 : i32, i32
  }
}

</mosaic_0001>

<llo_original>
// kernel: tpu_custom_call.1
$region0: #{tpu_custom_call.1}
  #allocation0 [shape = 'u32[]', space=smem, size = 0x4, offset = 0x4, fixed_abs, tag = 'smem constant byte address 0x4 - core index']
  #allocation1 [shape = 'u32[144,128]{1,0:T(1,128)}', space=vmem, size = 0x12000, scoped, tag = 'internal scratch']
  %s0 = inlined_call_operand.hbm [shape: f32[192,128], index: 0, kind: input, shape index: {}]
  %s1 = inlined_call_operand.hbm [shape: f32[192,128], index: 1, kind: input, shape index: {}]
  %s2 = inlined_call_operand.hbm [shape: s8[192,128], index: 2, kind: output, shape index: {}]
  %s3 = sld [smem:[#allocation0]]
  $region49: #{tpu_custom_call.1} parent=0
    _
  %s5 = ssub.s32 1, %s3
  %s6 = scalar_select 0, %s5, %s3
  $region1: #{tpu_custom_call.1} parent=0
    #allocation2 [shape = 'u8[98304]{0}', space=vmem, size = 0x18000, scoped, tag = 'input window, operand 0']
    #allocation3 [shape = 's32[2]{0}', space=sflag, size = 0x8, scoped, tag = 'scoped memory for tpu_custom_call.1']
    #allocation4 [shape = 's32[2]{0}', space=sflag, size = 0x8, scoped, tag = 'scoped memory for tpu_custom_call.1']
    #allocation5 [shape = 'u8[98304]{0}', space=vmem, size = 0x18000, scoped, tag = 'input window, operand 1']
    #allocation6 [shape = 's32[2]{0}', space=sflag, size = 0x8, scoped, tag = 'scoped memory for tpu_custom_call.1']
    #allocation7 [shape = 'u8[24576]{0}', space=vmem, size = 0x6000, scoped, tag = 'output window, operand 0']
    %7 = vsyncpa [#allocation3], 0
    %s8 = scalar_lea.sflag [#allocation3], 1
    %9 = vsyncpa %s8, 0
    %10 = vsyncpa [#allocation6], 0
    %s11 = scalar_lea.sflag [#allocation6], 1
    %12 = vsyncpa %s11, 0
    %13 = vsyncpa [#allocation4], 0
    %s14 = scalar_lea.sflag [#allocation4], 1
    %15 = vsyncpa %s14, 0
    loop: start=0, step=1, limit=4
    $region2: #{tpu_custom_call.1} parent=1 // loop_pre_header
      _
    $region3: #{tpu_custom_call.1} parent=1 // loop_header
      %s17 = sphi 0, %s21
      %p18 = scmp.ge.s32.totalorder %s17, 4
      %s27 = sphi 0, %s29
      %s30 = sphi 0, %s27
      %s31 = sphi 0, %s30
      %s47 = sphi 0, %s31
      %s53 = sphi 0, %s55
      %s56 = sphi 0, %s53
      %s57 = sphi 0, %s56
      %s73 = sphi 0, %s57
      %s79 = sphi 0, %s81
      %s82 = sphi 0, %s79
      %s83 = sphi 0, %s82
      %s99 = sphi 0, %s83
    $region4: #{tpu_custom_call.1} parent=1 // loop_header_branch
      %20 = sbr.rel (%p18) target = $region8
    $region5: #{tpu_custom_call.1} parent=1 // loop_body
      %s22 = ssub.s32 %s17, 1
      %s23 = ssub.s32 %s17, 2
      %s24 = sadd.s32 %s17, 1
      %s25 = ssub.s32 %s17, %s24
      %p26 = scmp.eq.s32.totalorder %s25, 0
      %s28 = sadd.s32 %s27, 1
      %s29 = scalar_select %p26, %s27, %s28
      %p32 = pneg %p26
      %p33 = scmp.eq.s32.totalorder %s17, 1
      %p34 = por %p32, %p33
      %p35 = scmp.ne.s32.totalorder %s27, %s30
      %p36 = scmp.eq.s32.totalorder %s17, 0
      %p37 = por %p35, %p36
      %p38 = scmp.ne.s32.totalorder %s27, %s30
      %p39 = scmp.eq.s32.totalorder %s22, 1
      %p40 = por %p38, %p39
      %p41 = scmp.ne.s32.totalorder %s30, %s31
      %p42 = scmp.eq.s32.totalorder %s22, 0
      %p43 = por %p41, %p42
      %p44 = scmp.ne.s32.totalorder %s30, %s31
      %p45 = scmp.eq.s32.totalorder %s23, 1
      %p46 = por %p44, %p45
      %p48 = scmp.ne.s32.totalorder %s31, %s47
      %p49 = scmp.eq.s32.totalorder %s23, 0
      %p50 = por %p48, %p49
      %s51 = ssub.s32 %s17, %s24
      %p52 = scmp.eq.s32.totalorder %s51, 0
      %s54 = sadd.s32 %s53, 1
      %s55 = scalar_select %p52, %s53, %s54
      %p58 = pneg %p52
      %p59 = scmp.eq.s32.totalorder %s17, 1
      %p60 = por %p58, %p59
      %p61 = scmp.ne.s32.totalorder %s53, %s56
      %p62 = scmp.eq.s32.totalorder %s17, 0
      %p63 = por %p61, %p62
      %p64 = scmp.ne.s32.totalorder %s53, %s56
      %p65 = scmp.eq.s32.totalorder %s22, 1
      %p66 = por %p64, %p65
      %p67 = scmp.ne.s32.totalorder %s56, %s57
      %p68 = scmp.eq.s32.totalorder %s22, 0
      %p69 = por %p67, %p68
      %p70 = scmp.ne.s32.totalorder %s56, %s57
      %p71 = scmp.eq.s32.totalorder %s23, 1
      %p72 = por %p70, %p71
      %p74 = scmp.ne.s32.totalorder %s57, %s73
      %p75 = scmp.eq.s32.totalorder %s23, 0
      %p76 = por %p74, %p75
      %s77 = ssub.s32 %s17, %s24
      %p78 = scmp.eq.s32.totalorder %s77, 0
      %s80 = sadd.s32 %s79, 1
      %s81 = scalar_select %p78, %s79, %s80
      %p84 = pneg %p78
      %p85 = scmp.eq.s32.totalorder %s17, 1
      %p86 = por %p84, %p85
      %p87 = scmp.ne.s32.totalorder %s79, %s82
      %p88 = scmp.eq.s32.totalorder %s17, 0
      %p89 = por %p87, %p88
      %p90 = scmp.ne.s32.totalorder %s79, %s82
      %p91 = scmp.eq.s32.totalorder %s22, 1
      %p92 = por %p90, %p91
      %p93 = scmp.ne.s32.totalorder %s82, %s83
      %p94 = scmp.eq.s32.totalorder %s22, 0
      %p95 = por %p93, %p94
      %p96 = scmp.ne.s32.totalorder %s82, %s83
      %p97 = scmp.eq.s32.totalorder %s23, 1
      %p98 = por %p96, %p97
      %p100 = scmp.ne.s32.totalorder %s83, %s99
      %p101 = scmp.eq.s32.totalorder %s23, 0
      %p102 = por %p100, %p101
      %p103 = scmp.le.s32.totalorder 1, %s17
      %p104 = scmp.lt.s32.totalorder %s17, 3
      %p105 = pnand %p103, %p104
      %p106 = pneg %p105
      // Predicated region
      $region9: #{tpu_custom_call.1} parent=5 // pred_check
        _
      $region10: #{tpu_custom_call.1} parent=5 // pred_check_branch
        %108 = sbr.rel (%p105) target = $region12
      $region11: #{tpu_custom_call.1} parent=5 // pred_region
        %s109 = ssub.s32 %s17, 1
      $region12: #{tpu_custom_call.1} parent=5 // pred_fallthru
        _
      %p110 = scmp.lt.s32.totalorder %s17, 2
      // Predicated region
      $region13: #{tpu_custom_call.1} parent=5 // pred_check
        %p111 = pneg %p110
      $region14: #{tpu_custom_call.1} parent=5 // pred_check_branch
        %113 = sbr.rel (%p111) target = $region16
      $region15: #{tpu_custom_call.1} parent=5 // pred_region
        // Predicated region
        $region17: #{tpu_custom_call.1} parent=15 // pred_check
          %p114 = pneg %p37
        $region18: #{tpu_custom_call.1} parent=15 // pred_check_branch
          %116 = sbr.rel (%p114) target = $region20
        $region19: #{tpu_custom_call.1} parent=15 // pred_region
          %s117 = sand.u32 %s27, 1
          %s118 = scalar_lea.sflag [#allocation3], %s117
          %s119 = sand.u32 %s27, 1
          %s120 = smul.addr %s119, 96
          %s121 = scalar_lea.vmem [#allocation2], %s120
          %s122 = smul.u32 12, %s17
          %s124 = ssub.s32 1536, 1536
          %125 = vsyncadd %s118, %s124
          %s126 = smul.addr %s122, 128
          %s127 = scalar_lea.hbm %s0, %s126
          %s128 = sshll.u32 %s121, 4
          %s129 = int_to_ptr.vmem [resolvable:$true] %s128
          %134 = dma.hbm_to_vmem [thread:$0]  %s127, 1536, %s129, %s118, 128, 128, 8
        $region20: #{tpu_custom_call.1} parent=15 // pred_fallthru
          _
        // Predicated region
        $region21: #{tpu_custom_call.1} parent=15 // pred_check
          %p135 = pneg %p63
        $region22: #{tpu_custom_call.1} parent=15 // pred_check_branch
          %137 = sbr.rel (%p135) target = $region24
        $region23: #{tpu_custom_call.1} parent=15 // pred_region
          %s138 = sand.u32 %s53, 1
          %s139 = scalar_lea.sflag [#allocation6], %s138
          %s140 = sand.u32 %s53, 1
          %s141 = smul.addr %s140, 96
          %s142 = scalar_lea.vmem [#allocation5], %s141
          %s143 = smul.u32 12, %s17
          %s145 = ssub.s32 1536, 1536
          %146 = vsyncadd %s139, %s145
          %s147 = smul.addr %s143, 128
          %s148 = scalar_lea.hbm %s1, %s147
          %s149 = sshll.u32 %s142, 4
          %s150 = int_to_ptr.vmem [resolvable:$true] %s149
          %155 = dma.hbm_to_vmem [thread:$0]  %s148, 1536, %s150, %s139, 128, 128, 8
        $region24: #{tpu_custom_call.1} parent=15 // pred_fallthru
          _
      $region16: #{tpu_custom_call.1} parent=5 // pred_fallthru
        _
      %p156 = scmp.le.s32.totalorder 1, %s17
      %p157 = scmp.lt.s32.totalorder %s17, 3
      %p158 = pnand %p156, %p157
      %p159 = pneg %p158
      // Predicated region
      $region25: #{tpu_custom_call.1} parent=5 // pred_check
        _
      $region26: #{tpu_custom_call.1} parent=5 // pred_check_branch
        %161 = sbr.rel (%p158) target = $region28
      $region27: #{tpu_custom_call.1} parent=5 // pred_region
        %s162 = ssub.s32 %s17, 1
        %s163 = sand.u32 %s30, 1
        %s164 = scalar_lea.sflag [#allocation3], %s163
        %s165 = sand.u32 %s30, 1
        %s166 = smul.addr %s165, 96
        %s167 = scalar_lea.vmem [#allocation2], %s166
        // Predicated region
        $region29: #{tpu_custom_call.1} parent=27 // pred_check
          %p168 = pneg %p43
        $region30: #{tpu_custom_call.1} parent=27 // pred_check_branch
          %170 = sbr.rel (%p168) target = $region32
        $region31: #{tpu_custom_call.1} parent=27 // pred_region
          %171 = dma.done %s164, 1536
        $region32: #{tpu_custom_call.1} parent=27 // pred_fallthru
          _
        %s172 = sand.u32 %s56, 1
        %s173 = scalar_lea.sflag [#allocation6], %s172
        %s174 = sand.u32 %s56, 1
        %s175 = smul.addr %s174, 96
        %s176 = scalar_lea.vmem [#allocation5], %s175
        // Predicated region
        $region33: #{tpu_custom_call.1} parent=27 // pred_check
          %p177 = pneg %p69
        $region34: #{tpu_custom_call.1} parent=27 // pred_check_branch
          %179 = sbr.rel (%p177) target = $region36
        $region35: #{tpu_custom_call.1} parent=27 // pred_region
          %180 = dma.done %s173, 1536
        $region36: #{tpu_custom_call.1} parent=27 // pred_fallthru
          _
        %s181 = sand.u32 %s30, 1
        %s182 = scalar_lea.sflag [#allocation3], %s181
        %s183 = sand.u32 %s30, 1
        %s184 = smul.addr %s183, 96
        %s185 = scalar_lea.vmem [#allocation2], %s184
        %p186 = pneg %p43
        %p187 = pneg %p40
        %s188 = sand.u32 %s56, 1
        %s189 = scalar_lea.sflag [#allocation6], %s188
        %s190 = sand.u32 %s56, 1
        %s191 = smul.addr %s190, 96
        %s192 = scalar_lea.vmem [#allocation5], %s191
        %p193 = pneg %p69
        %p194 = pneg %p66
        %p195 = pneg %p95
        %p196 = pneg %p92
        %s197 = sand.u32 %s82, 1
        %s198 = scalar_lea.sflag [#allocation4], %s197
        %s199 = sand.u32 %s82, 1
        %s200 = smul.addr %s199, 24
        %s201 = scalar_lea.vmem [#allocation7], %s200
        %s202 = smul.u32 12, %s22
        %s203 = smul.u32 12, %s22
        %s204 = smul.u32 3, %s22
        %v207 = vld [vmem:[%s167] sm:$0xff]
        %v208 = vld [vmem:[%s167 + $0x8] sm:$0xff]
        %v209 = vld [vmem:[%s167 + $0x10] sm:$0xff]
        %v210 = vld [vmem:[%s167 + $0x18] sm:$0xff]
        %v211 = vld [vmem:[%s167 + $0x20] sm:$0xff]
        %v212 = vld [vmem:[%s167 + $0x28] sm:$0xff]
        %v213 = vld [vmem:[%s167 + $0x30] sm:$0xff]
        %v214 = vld [vmem:[%s167 + $0x38] sm:$0xff]
        %v215 = vld [vmem:[%s167 + $0x40] sm:$0xff]
        %v216 = vld [vmem:[%s167 + $0x48] sm:$0xff]
        %v217 = vld [vmem:[%s167 + $0x50] sm:$0xff]
        %v218 = vld [vmem:[%s167 + $0x58] sm:$0xff]
        %v219 = vld [vmem:[%s176] sm:$0xff]
        %v220 = vld [vmem:[%s176 + $0x8] sm:$0xff]
        %v221 = vld [vmem:[%s176 + $0x10] sm:$0xff]
        %v222 = vld [vmem:[%s176 + $0x18] sm:$0xff]
        %v223 = vld [vmem:[%s176 + $0x20] sm:$0xff]
        %v224 = vld [vmem:[%s176 + $0x28] sm:$0xff]
        %v225 = vld [vmem:[%s176 + $0x30] sm:$0xff]
        %v226 = vld [vmem:[%s176 + $0x38] sm:$0xff]
        %v227 = vld [vmem:[%s176 + $0x40] sm:$0xff]
        %v228 = vld [vmem:[%s176 + $0x48] sm:$0xff]
        %v229 = vld [vmem:[%s176 + $0x50] sm:$0xff]
        %v230 = vld [vmem:[%s176 + $0x58] sm:$0xff]
        %231 = vrot.lane.b32.xlu0 %v207, 1
        %v232 = vpop.permute.xlu0 %231
        %233 = vrot.lane.b32.xlu0 %v208, 1
        %v234 = vpop.permute.xlu0 %233
        %235 = vrot.lane.b32.xlu0 %v209, 1
        %v236 = vpop.permute.xlu0 %235
        %237 = vrot.lane.b32.xlu0 %v210, 1
        %v238 = vpop.permute.xlu0 %237
        %239 = vrot.lane.b32.xlu0 %v211, 1
        %v240 = vpop.permute.xlu0 %239
        %241 = vrot.lane.b32.xlu0 %v212, 1
        %v242 = vpop.permute.xlu0 %241
        %243 = vrot.lane.b32.xlu0 %v213, 1
        %v244 = vpop.permute.xlu0 %243
        %245 = vrot.lane.b32.xlu0 %v214, 1
        %v246 = vpop.permute.xlu0 %245
        %247 = vrot.lane.b32.xlu0 %v215, 1
        %v248 = vpop.permute.xlu0 %247
        %249 = vrot.lane.b32.xlu0 %v216, 1
        %v250 = vpop.permute.xlu0 %249
        %251 = vrot.lane.b32.xlu0 %v217, 1
        %v252 = vpop.permute.xlu0 %251
        %253 = vrot.lane.b32.xlu0 %v218, 1
        %v254 = vpop.permute.xlu0 %253
        %255 = vrot.lane.b32.xlu0 %v207, 127
        %v256 = vpop.permute.xlu0 %255
        %257 = vrot.lane.b32.xlu0 %v208, 127
        %v258 = vpop.permute.xlu0 %257
        %259 = vrot.lane.b32.xlu0 %v209, 127
        %v260 = vpop.permute.xlu0 %259
        %261 = vrot.lane.b32.xlu0 %v210, 127
        %v262 = vpop.permute.xlu0 %261
        %263 = vrot.lane.b32.xlu0 %v211, 127
        %v264 = vpop.permute.xlu0 %263
        %265 = vrot.lane.b32.xlu0 %v212, 127
        %v266 = vpop.permute.xlu0 %265
        %267 = vrot.lane.b32.xlu0 %v213, 127
        %v268 = vpop.permute.xlu0 %267
        %269 = vrot.lane.b32.xlu0 %v214, 127
        %v270 = vpop.permute.xlu0 %269
        %271 = vrot.lane.b32.xlu0 %v215, 127
        %v272 = vpop.permute.xlu0 %271
        %273 = vrot.lane.b32.xlu0 %v216, 127
        %v274 = vpop.permute.xlu0 %273
        %275 = vrot.lane.b32.xlu0 %v217, 127
        %v276 = vpop.permute.xlu0 %275
        %277 = vrot.lane.b32.xlu0 %v218, 127
        %v278 = vpop.permute.xlu0 %277
        %v279 = vmax.f32 %v232, %v256
        %v280 = vmax.f32 %v234, %v258
        %v281 = vmax.f32 %v236, %v260
        %v282 = vmax.f32 %v238, %v262
        %v283 = vmax.f32 %v240, %v264
        %v284 = vmax.f32 %v242, %v266
        %v285 = vmax.f32 %v244, %v268
        %v286 = vmax.f32 %v246, %v270
        %v287 = vmax.f32 %v248, %v272
        %v288 = vmax.f32 %v250, %v274
        %v289 = vmax.f32 %v252, %v276
        %v290 = vmax.f32 %v254, %v278
        %v291 = vmax.f32 %v207, %v279
        %v292 = vmax.f32 %v208, %v280
        %v293 = vmax.f32 %v209, %v281
        %v294 = vmax.f32 %v210, %v282
        %v295 = vmax.f32 %v211, %v283
        %v296 = vmax.f32 %v212, %v284
        %v297 = vmax.f32 %v213, %v285
        %v298 = vmax.f32 %v214, %v286
        %v299 = vmax.f32 %v215, %v287
        %v300 = vmax.f32 %v216, %v288
        %v301 = vmax.f32 %v217, %v289
        %v302 = vmax.f32 %v218, %v290
        %v303 = vrot.slane %v291, 7
        %v304 = vrot.slane %v292, 7
        %v305 = vrot.slane %v293, 7
        %v306 = vrot.slane %v294, 7
        %v307 = vrot.slane %v295, 7
        %v308 = vrot.slane %v296, 7
        %v309 = vrot.slane %v297, 7
        %v310 = vrot.slane %v298, 7
        %v311 = vrot.slane %v299, 7
        %v312 = vrot.slane %v300, 7
        %v313 = vrot.slane %v301, 7
        %v314 = vrot.slane %v302, 7
        %v315 = vlaneseq
        %v316 = vshrl.u32 %v315, 7
        %vm317 = vcmp.lt.s32.totalorder %v316, 1
        %v318 = vsel %vm317, %v313, %v314
        %v319 = vsel %vm317, %v312, %v313
        %v320 = vsel %vm317, %v311, %v312
        %v321 = vsel %vm317, %v310, %v311
        %v322 = vsel %vm317, %v309, %v310
        %v323 = vsel %vm317, %v308, %v309
        %v324 = vsel %vm317, %v307, %v308
        %v325 = vsel %vm317, %v306, %v307
        %v326 = vsel %vm317, %v305, %v306
        %v327 = vsel %vm317, %v304, %v305
        %v328 = vsel %vm317, %v303, %v304
        %v329 = vsel %vm317, %v314, %v303
        %v330 = vrot.slane %v291, 1
        %v331 = vrot.slane %v292, 1
        %v332 = vrot.slane %v293, 1
        %v333 = vrot.slane %v294, 1
        %v334 = vrot.slane %v295, 1
        %v335 = vrot.slane %v296, 1
        %v336 = vrot.slane %v297, 1
        %v337 = vrot.slane %v298, 1
        %v338 = vrot.slane %v299, 1
        %v339 = vrot.slane %v300, 1
        %v340 = vrot.slane %v301, 1
        %v341 = vrot.slane %v302, 1
        %vm342 = vcmp.lt.s32.totalorder %v316, 7
        %v343 = vsel %vm342, %v340, %v341
        %v344 = vsel %vm342, %v339, %v340
        %v345 = vsel %vm342, %v338, %v339
        %v346 = vsel %vm342, %v337, %v338
        %v347 = vsel %vm342, %v336, %v337
        %v348 = vsel %vm342, %v335, %v336
        %v349 = vsel %vm342, %v334, %v335
        %v350 = vsel %vm342, %v333, %v334
        %v351 = vsel %vm342, %v332, %v333
        %v352 = vsel %vm342, %v331, %v332
        %v353 = vsel %vm342, %v330, %v331
        %v354 = vsel %vm342, %v341, %v330
        %v355 = vmax.f32 %v329, %v353
        %v356 = vmax.f32 %v328, %v352
        %v357 = vmax.f32 %v327, %v351
        %v358 = vmax.f32 %v326, %v350
        %v359 = vmax.f32 %v325, %v349
        %v360 = vmax.f32 %v324, %v348
        %v361 = vmax.f32 %v323, %v347
        %v362 = vmax.f32 %v322, %v346
        %v363 = vmax.f32 %v321, %v345
        %v364 = vmax.f32 %v320, %v344
        %v365 = vmax.f32 %v319, %v343
        %v366 = vmax.f32 %v318, %v354
        %v367 = vmax.f32 %v291, %v355
        %v368 = vmax.f32 %v292, %v356
        %v369 = vmax.f32 %v293, %v357
        %v370 = vmax.f32 %v294, %v358
        %v371 = vmax.f32 %v295, %v359
        %v372 = vmax.f32 %v296, %v360
        %v373 = vmax.f32 %v297, %v361
        %v374 = vmax.f32 %v298, %v362
        %v375 = vmax.f32 %v299, %v363
        %v376 = vmax.f32 %v300, %v364
        %v377 = vmax.f32 %v301, %v365
        %v378 = vmax.f32 %v302, %v366
        %vm379 = vcmp.eq.f32.partialorder %v207, %v367
        %vm380 = vcmp.eq.f32.partialorder %v208, %v368
        %vm381 = vcmp.eq.f32.partialorder %v209, %v369
        %vm382 = vcmp.eq.f32.partialorder %v210, %v370
        %vm383 = vcmp.eq.f32.partialorder %v211, %v371
        %vm384 = vcmp.eq.f32.partialorder %v212, %v372
        %vm385 = vcmp.eq.f32.partialorder %v213, %v373
        %vm386 = vcmp.eq.f32.partialorder %v214, %v374
        %vm387 = vcmp.eq.f32.partialorder %v215, %v375
        %vm388 = vcmp.eq.f32.partialorder %v216, %v376
        %vm389 = vcmp.eq.f32.partialorder %v217, %v377
        %vm390 = vcmp.eq.f32.partialorder %v218, %v378
        %vm391 = vcmp.ge.f32.partialorder %v207, 0.7
        %vm392 = vcmp.ge.f32.partialorder %v208, 0.7
        %vm393 = vcmp.ge.f32.partialorder %v209, 0.7
        %vm394 = vcmp.ge.f32.partialorder %v210, 0.7
        %vm395 = vcmp.ge.f32.partialorder %v211, 0.7
        %vm396 = vcmp.ge.f32.partialorder %v212, 0.7
        %vm397 = vcmp.ge.f32.partialorder %v213, 0.7
        %vm398 = vcmp.ge.f32.partialorder %v214, 0.7
        %vm399 = vcmp.ge.f32.partialorder %v215, 0.7
        %vm400 = vcmp.ge.f32.partialorder %v216, 0.7
        %vm401 = vcmp.ge.f32.partialorder %v217, 0.7
        %vm402 = vcmp.ge.f32.partialorder %v218, 0.7
        %vm403 = vmand %vm379, %vm391
        %vm404 = vmand %vm380, %vm392
        %vm405 = vmand %vm381, %vm393
        %vm406 = vmand %vm382, %vm394
        %vm407 = vmand %vm383, %vm395
        %vm408 = vmand %vm384, %vm396
        %vm409 = vmand %vm385, %vm397
        %vm410 = vmand %vm386, %vm398
        %vm411 = vmand %vm387, %vm399
        %vm412 = vmand %vm388, %vm400
        %vm413 = vmand %vm389, %vm401
        %vm414 = vmand %vm390, %vm402
        %vm415 = vcmp.ge.f32.partialorder %v219, 0.7
        %vm416 = vcmp.ge.f32.partialorder %v220, 0.7
        %vm417 = vcmp.ge.f32.partialorder %v221, 0.7
        %vm418 = vcmp.ge.f32.partialorder %v222, 0.7
        %vm419 = vcmp.ge.f32.partialorder %v223, 0.7
        %vm420 = vcmp.ge.f32.partialorder %v224, 0.7
        %vm421 = vcmp.ge.f32.partialorder %v225, 0.7
        %vm422 = vcmp.ge.f32.partialorder %v226, 0.7
        %vm423 = vcmp.ge.f32.partialorder %v227, 0.7
        %vm424 = vcmp.ge.f32.partialorder %v228, 0.7
        %vm425 = vcmp.ge.f32.partialorder %v229, 0.7
        %vm426 = vcmp.ge.f32.partialorder %v230, 0.7
        %vm427 = vmand %vm403, %vm415
        %vm428 = vmand %vm404, %vm416
        %vm429 = vmand %vm405, %vm417
        %vm430 = vmand %vm406, %vm418
        %vm431 = vmand %vm407, %vm419
        %vm432 = vmand %vm408, %vm420
        %vm433 = vmand %vm409, %vm421
        %vm434 = vmand %vm410, %vm422
        %vm435 = vmand %vm411, %vm423
        %vm436 = vmand %vm412, %vm424
        %vm437 = vmand %vm413, %vm425
        %vm438 = vmand %vm414, %vm426
        %vm439 = vmpackc.low %vm428, %vm427
        %vm440 = vmpackc.low %vm430, %vm429
        %vm441 = vmpackc.even %vm440, %vm439
        %vm442 = vmpackc.low %vm432, %vm431
        %vm443 = vmpackc.low %vm434, %vm433
        %vm444 = vmpackc.even %vm443, %vm442
        %vm445 = vmpackc.low %vm436, %vm435
        %vm446 = vmpackc.low %vm438, %vm437
        %vm447 = vmpackc.even %vm446, %vm445
        %v448 = vsel %vm441, 16843009, 0
        %v449 = vsel %vm444, 16843009, 0
        %v450 = vsel %vm447, 16843009, 0
        %451 = vst [vmem:[%s201] sm:$0xff] %v448
        %452 = vst [vmem:[%s201 + $0x8] sm:$0xff] %v449
        %453 = vst [vmem:[%s201 + $0x10] sm:$0xff] %v450
        %s454 = sand.u32 %s82, 1
        %s455 = scalar_lea.sflag [#allocation4], %s454
        %s456 = sand.u32 %s82, 1
        %s457 = smul.addr %s456, 24
        %s458 = scalar_lea.vmem [#allocation7], %s457
        // Predicated region
        $region37: #{tpu_custom_call.1} parent=27 // pred_check
          %p459 = pneg %p92
        $region38: #{tpu_custom_call.1} parent=27 // pred_check_branch
          %461 = sbr.rel (%p459) target = $region40
        $region39: #{tpu_custom_call.1} parent=27 // pred_region
          %s462 = smul.u32 3, %s22
          %s464 = ssub.s32 384, 384
          %465 = vsyncadd %s455, %s464
          %s466 = smul.addr %s462, 128
          %s467 = scalar_lea.hbm %s2, %s466
          %s468 = sshll.u32 %s458, 4
          %s469 = int_to_ptr.vmem [resolvable:$true] %s468
          %474 = dma.vmem_to_hbm [thread:$0]  %s469, 384, %s467, %s455, 128, 128, 8
        $region40: #{tpu_custom_call.1} parent=27 // pred_fallthru
          _
      $region28: #{tpu_custom_call.1} parent=5 // pred_fallthru
        _
      %p475 = scmp.le.s32.totalorder 2, %s17
      // Predicated region
      $region41: #{tpu_custom_call.1} parent=5 // pred_check
        %p476 = pneg %p475
      $region42: #{tpu_custom_call.1} parent=5 // pred_check_branch
        %478 = sbr.rel (%p476) target = $region44
      $region43: #{tpu_custom_call.1} parent=5 // pred_region
        %s479 = ssub.s32 %s17, 2
        // Predicated region
        $region45: #{tpu_custom_call.1} parent=43 // pred_check
          %p480 = pneg %p98
        $region46: #{tpu_custom_call.1} parent=43 // pred_check_branch
          %482 = sbr.rel (%p480) target = $region48
        $region47: #{tpu_custom_call.1} parent=43 // pred_region
          %s483 = sand.u32 %s83, 1
          %s484 = scalar_lea.sflag [#allocation4], %s483
          %s485 = sand.u32 %s83, 1
          %s486 = smul.addr %s485, 24
          %s487 = scalar_lea.vmem [#allocation7], %s486
          %488 = dma.done %s484, 384
        $region48: #{tpu_custom_call.1} parent=43 // pred_fallthru
          _
      $region44: #{tpu_custom_call.1} parent=5 // pred_fallthru
        _
    $region6: #{tpu_custom_call.1} parent=1 // loop_footer
      %s21 = sadd.s32 1, %s17
    $region7: #{tpu_custom_call.1} parent=1 // loop_footer_branch
      %16 = sbr.rel target = $region3
    $region8: #{tpu_custom_call.1} parent=1 // loop_exit
      _
    %489 = vsyncpa [#allocation3], 1
    %s490 = scalar_lea.sflag [#allocation3], 1
    %491 = vsyncpa %s490, 1
    %492 = vsyncpa [#allocation6], 1
    %s493 = scalar_lea.sflag [#allocation6], 1
    %494 = vsyncpa %s493, 1
    %495 = vsyncpa [#allocation4], 1
    %s496 = scalar_lea.sflag [#allocation4], 1
    %497 = vsyncpa %s496, 1

</llo_original>
